<compile_context>
chip_gen: v6e
topology: v6e:2x2x1
jax: 0.10.0
libtpu: 0.0.40
codegen_flags: <defaults>
</compile_context>

<pallas_src>
import jax
import jax.numpy as jnp
from jax.experimental import pallas as pl
from jax.experimental.pallas import tpu as pltpu


def adapter_kernel(x_ref, w1_ref, b1_ref, w2_ref, b2_ref, o_ref):
    # x_ref:  (tm, D)  x.dtype     w1_ref: (D, Hp)  b1_ref: (1, Hp) f32
    # w2_ref: (Hp, D)              b2_ref: (1, D)   f32     o_ref: (tm, D)
    x = x_ref[...].astype(w1_ref.dtype)          # cast in-kernel (no host pre-pass)
    h = jnp.dot(x, w1_ref[...], preferred_element_type=jnp.float32) + b1_ref[...]
    h = jnp.maximum(h, 0.0)                      # relu activation_fn (f32)
    # TODO(synk): training-mode activation_dropout (PRNG mask + scale) and
    # quant_noise are eval-time identities and are intentionally not implemented.
    y = jnp.dot(h.astype(w2_ref.dtype), w2_ref[...],
                preferred_element_type=jnp.float32) + b2_ref[...]
    o_ref[...] = y.astype(o_ref.dtype)


def _round_up(a, b):
    return (a + b - 1) // b * b


def _sublane(dtype):
    return max(8, 32 // jnp.dtype(dtype).itemsize)


def prepare_adapter_params(w1, b1, w2, b2, compute_dtype=jnp.bfloat16):
    """One-time weight preprocessing (hoisted out of the per-call hot path).

    w1: (D, H), b1: (H,), w2: (H, D), b2: (D,)  ->  padded, cast params tuple.
    compute_dtype=None keeps the original weight dtype (exact f32 path).
    """
    D, H = w1.shape
    Hp = _round_up(H, 128)                       # lane-dense hidden dim (exact pad)
    cd = jnp.dtype(w1.dtype) if compute_dtype is None else jnp.dtype(compute_dtype)
    w1p = w1.astype(cd)
    w2p = w2.astype(cd)
    b1p = b1.astype(jnp.float32)
    if Hp != H:
        w1p = jnp.pad(w1p, ((0, 0), (0, Hp - H)))
        w2p = jnp.pad(w2p, ((0, Hp - H), (0, 0)))
        b1p = jnp.pad(b1p, ((0, Hp - H),))
    b2p = b2.astype(jnp.float32).reshape(1, D)
    return (w1p, b1p.reshape(1, Hp), w2p, b2p)


def adapter_forward(x, params, *, out_dtype=None, tm=None):
    """x: (T, B, D) or (M, D).  params: output of prepare_adapter_params.

    out_dtype: output dtype (default: x.dtype).
    tm: optional row-tile cap; by default tm is sized from the VMEM budget.
    """
    w1p, b1_2d, w2p, b2_2d = params
    orig_shape = x.shape
    D = orig_shape[-1]
    Hp = w1p.shape[1]
    x2d = x.reshape(-1, D)
    M = x2d.shape[0]
    out_dtype = jnp.dtype(x.dtype) if out_dtype is None else jnp.dtype(out_dtype)

    # ---- generation-aware VMEM budget -------------------------------------
    try:
        vmem_cap = int(pltpu.get_tpu_info().vmem_capacity_bytes)
    except Exception:
        vmem_cap = 64 << 20                      # conservative fallback (v7x-safe)
    usable = (vmem_cap * 3) // 4                 # ~48 MiB on v7x, ~96 MiB on v5e/v6e

    bc = jnp.dtype(w1p.dtype).itemsize
    bx = jnp.dtype(x.dtype).itemsize
    bo = out_dtype.itemsize
    weight_bytes = 2 * D * Hp * bc + 4 * (Hp + D)          # single-buffered residents
    # per-row streaming + scratch: x tile (2 bufs) + out tile (2 bufs)
    # + f32 hidden/output intermediates + bf16 cast of h.
    per_row = 2 * D * bx + 2 * D * bo + 6 * Hp + 4 * D

    row_align = max(_sublane(x.dtype), _sublane(out_dtype))
    budget = usable - weight_bytes - (4 << 20)
    tm_budget = (budget // per_row) if budget > 0 else row_align
    tm_eff = min(1024 if tm is None else tm, max(row_align, tm_budget))
    # Keep >= 2 row blocks whenever possible so ("parallel",) can shard the
    # grid across both v7x TensorCores.
    if M > row_align:
        tm_eff = min(tm_eff, _round_up(pl.cdiv(M, 2), row_align))
    tm_eff = min(tm_eff, _round_up(M, row_align))
    tm_eff = max(row_align, (tm_eff // row_align) * row_align)

    grid = pl.cdiv(M, tm_eff)                    # partial last block is masked by Pallas

    # Accurate (non-double-counted) requirement; weights counted at 2 buffers
    # only as a safety margin for the no-Buffered(1) fallback path.
    need = (2 * 2 * D * Hp * bc + 2 * 4 * (Hp + D)
            + tm_eff * per_row + (2 << 20))
    vmem_limit = int(min(max(need, 32 << 20), usable))

    def _run(single_buffered_weights):
        wkw = {}
        if single_buffered_weights:
            wkw = dict(pipeline_mode=pl.Buffered(1))   # constant index_map -> resident

        def wspec(shape):
            return pl.BlockSpec(shape, lambda i: (0, 0), **wkw)

        return pl.pallas_call(
            adapter_kernel,
            out_shape=jax.ShapeDtypeStruct((M, D), out_dtype),
            grid_spec=pltpu.PrefetchScalarGridSpec(
                num_scalar_prefetch=0,
                grid=(grid,),
                in_specs=[
                    pl.BlockSpec((tm_eff, D), lambda i: (i, 0)),   # x row tile (streamed)
                    wspec((D, Hp)),                                # W1 (resident)
                    wspec((1, Hp)),                                # b1
                    wspec((Hp, D)),                                # W2 (resident)
                    wspec((1, D)),                                 # b2
                ],
                out_specs=pl.BlockSpec((tm_eff, D), lambda i: (i, 0)),
            ),
            compiler_params=pltpu.CompilerParams(
                dimension_semantics=("parallel",),
                vmem_limit_bytes=vmem_limit),
        )(x2d, w1p, b1_2d, w2p, b2_2d)

    try:
        out = _run(True)
    except Exception:
        # Fallback for JAX versions where pipeline_mode=pl.Buffered(1) on a
        # constant-index BlockSpec is not supported.
        out = _run(False)

    return out.reshape(orig_shape[:-1] + (D,))


if __name__ == "__main__":
    # Small shapes consistent with the module: seq=7, batch=3, embed_dim=128,
    # red_fac=2 -> hidden=64 (padded to 128 inside prepare_adapter_params).
    # seq*batch = 21 rows, deliberately not tile-aligned to exercise the
    # masked partial last row block.
    seq_len, batch, embed_dim, red_fac = 7, 3, 128, 2
    hidden = embed_dim // red_fac

    key = jax.random.PRNGKey(0)
    kx, kw1, kb1, kw2, kb2 = jax.random.split(key, 5)

    x = jax.random.normal(kx, (seq_len, batch, embed_dim), dtype=jnp.float32)
    # Linear weights stored as (in, out).
    w1 = jax.random.normal(kw1, (embed_dim, hidden), dtype=jnp.float32) * 0.05
    b1 = jax.random.normal(kb1, (hidden,), dtype=jnp.float32) * 0.05
    w2 = jax.random.normal(kw2, (hidden, embed_dim), dtype=jnp.float32) * 0.05
    b2 = jax.random.normal(kb2, (embed_dim,), dtype=jnp.float32) * 0.05

    # Reference (plain JAX, f32).
    ref = jnp.maximum(x @ w1 + b1, 0.0) @ w2 + b2

    # 1) Exact f32 compute path; small tm forces multiple grid steps and
    #    exercises the partial last block + hidden-dim padding.
    params_f32 = prepare_adapter_params(w1, b1, w2, b2, compute_dtype=None)
    out_f32 = adapter_forward(x, params_f32, tm=16)
    out_f32 = jax.block_until_ready(out_f32)
    assert out_f32.shape == x.shape and out_f32.dtype == x.dtype
    assert jnp.allclose(out_f32, ref, atol=1e-5, rtol=1e-5), "f32 mismatch vs reference"

    # 2) Default optimized path (bf16 weights / bf16 MXU dots, f32 accumulate),
    #    auto row tile; looser tolerance for the intended precision change.
    params_bf16 = prepare_adapter_params(w1, b1, w2, b2)   # compute_dtype=bf16
    out_bf16 = adapter_forward(x, params_bf16)
    out_bf16 = jax.block_until_ready(out_bf16)
    assert out_bf16.shape == x.shape
    assert jnp.allclose(out_bf16, ref, atol=5e-2, rtol=5e-2), "bf16 mismatch vs reference"

    print("KERNEL_OK")
</pallas_src>

<mosaic_0001>
module attributes {stable_mosaic.version = 11 : i64} {
  func.func @adapter_kernel(%arg0: i32, %arg1: memref<16x128xf32, #tpu.memory_space<vmem>>, %arg2: memref<128x128xf32, #tpu.memory_space<vmem>>, %arg3: memref<1x128xf32, #tpu.memory_space<vmem>>, %arg4: memref<128x128xf32, #tpu.memory_space<vmem>>, %arg5: memref<1x128xf32, #tpu.memory_space<vmem>>, %arg6: memref<16x128xf32, #tpu.memory_space<vmem>>) attributes {dimension_semantics = [#tpu.dimension_semantics<parallel>], iteration_bounds = array<i64: 2>, scalar_prefetch = 0 : i64, scratch_operands = 0 : i64, tpu.core_type = #tpu.core_type<tc>, window_params = [{transform_indices = @transform_0, window_bounds = array<i64: 16, 128>}, {pipeline_mode = #tpu.pipeline_mode<synchronous>, transform_indices = @transform_1, window_bounds = array<i64: 128, 128>}, {pipeline_mode = #tpu.pipeline_mode<synchronous>, transform_indices = @transform_2, window_bounds = array<i64: 1, 128>}, {pipeline_mode = #tpu.pipeline_mode<synchronous>, transform_indices = @transform_3, window_bounds = array<i64: 128, 128>}, {pipeline_mode = #tpu.pipeline_mode<synchronous>, transform_indices = @transform_4, window_bounds = array<i64: 1, 128>}, {transform_indices = @transform_5, window_bounds = array<i64: 16, 128>}]} {
    %c0 = arith.constant 0 : index
    %c0_0 = arith.constant 0 : index
    %0 = vector.load %arg1[%c0, %c0_0] : memref<16x128xf32, #tpu.memory_space<vmem>>, vector<16x128xf32>
    %c0_1 = arith.constant 0 : index
    %c0_2 = arith.constant 0 : index
    %1 = vector.load %arg2[%c0_1, %c0_2] : memref<128x128xf32, #tpu.memory_space<vmem>>, vector<128x128xf32>
    %cst = arith.constant dense<0.000000e+00> : vector<16x128xf32>
    %2 = tpu.matmul %0, %1, %cst {dimension_numbers = #tpu.dot_dimension_numbers<[1], [0], [0], [1], [0, 0, 1, 1], [], []>} : vector<16x128xf32>, vector<128x128xf32>, vector<16x128xf32> -> vector<16x128xf32>
    %c0_3 = arith.constant 0 : index
    %c0_4 = arith.constant 0 : index
    %3 = vector.load %arg3[%c0_3, %c0_4] : memref<1x128xf32, #tpu.memory_space<vmem>>, vector<1x128xf32>
    %4 = vector.broadcast %3 : vector<1x128xf32> to vector<16x128xf32>
    %5 = arith.addf %2, %4 : vector<16x128xf32>
    %cst_5 = arith.constant 0.000000e+00 : f32
    %6 = vector.broadcast %cst_5 : f32 to vector<16x128xf32>
    %7 = arith.maximumf %5, %6 : vector<16x128xf32>
    %c0_6 = arith.constant 0 : index
    %c0_7 = arith.constant 0 : index
    %8 = vector.load %arg4[%c0_6, %c0_7] : memref<128x128xf32, #tpu.memory_space<vmem>>, vector<128x128xf32>
    %cst_8 = arith.constant dense<0.000000e+00> : vector<16x128xf32>
    %9 = tpu.matmul %7, %8, %cst_8 {dimension_numbers = #tpu.dot_dimension_numbers<[1], [0], [0], [1], [0, 0, 1, 1], [], []>} : vector<16x128xf32>, vector<128x128xf32>, vector<16x128xf32> -> vector<16x128xf32>
    %c0_9 = arith.constant 0 : index
    %c0_10 = arith.constant 0 : index
    %10 = vector.load %arg5[%c0_9, %c0_10] : memref<1x128xf32, #tpu.memory_space<vmem>>, vector<1x128xf32>
    %11 = vector.broadcast %10 : vector<1x128xf32> to vector<16x128xf32>
    %12 = arith.addf %9, %11 : vector<16x128xf32>
    %c0_11 = arith.constant 0 : index
    %c0_12 = arith.constant 0 : index
    %13 = vector.load %arg6[%c0_11, %c0_12] : memref<16x128xf32, #tpu.memory_space<vmem>>, vector<16x128xf32>
    tpu.vector_store %arg6[%c0_11, %c0_12], %12 {strides = array<i32>} : memref<16x128xf32, #tpu.memory_space<vmem>>, vector<16x128xf32>,
    return
  }
  func.func @transform_0(%arg0: i32) -> (i32, i32) {
    %c0_i32 = arith.constant 0 : i32
    %c0_i32_0 = arith.constant 0 : i32
    return %arg0, %c0_i32 : i32, i32
  }
  func.func @transform_1(%arg0: i32) -> (i32, i32) {
    %c0_i32 = arith.constant 0 : i32
    %c0_i32_0 = arith.constant 0 : i32
    %c0_i32_1 = arith.constant 0 : i32
    return %c0_i32, %c0_i32_0 : i32, i32
  }
  func.func @transform_2(%arg0: i32) -> (i32, i32) {
    %c0_i32 = arith.constant 0 : i32
    %c0_i32_0 = arith.constant 0 : i32
    %c0_i32_1 = arith.constant 0 : i32
    return %c0_i32, %c0_i32_0 : i32, i32
  }
  func.func @transform_3(%arg0: i32) -> (i32, i32) {
    %c0_i32 = arith.constant 0 : i32
    %c0_i32_0 = arith.constant 0 : i32
    %c0_i32_1 = arith.constant 0 : i32
    return %c0_i32, %c0_i32_0 : i32, i32
  }
  func.func @transform_4(%arg0: i32) -> (i32, i32) {
    %c0_i32 = arith.constant 0 : i32
    %c0_i32_0 = arith.constant 0 : i32
    %c0_i32_1 = arith.constant 0 : i32
    return %c0_i32, %c0_i32_0 : i32, i32
  }
  func.func @transform_5(%arg0: i32) -> (i32, i32) {
    %c0_i32 = arith.constant 0 : i32
    %c0_i32_0 = arith.constant 0 : i32
    return %arg0, %c0_i32 : i32, i32
  }
}

module attributes {stable_mosaic.version = 11 : i64} {
  func.func @adapter_kernel(%arg0: i32, %arg1: memref<16x128xf32, #tpu.memory_space<vmem>>, %arg2: memref<128x128xf32, #tpu.memory_space<vmem>>, %arg3: memref<1x128xf32, #tpu.memory_space<vmem>>, %arg4: memref<128x128xf32, #tpu.memory_space<vmem>>, %arg5: memref<1x128xf32, #tpu.memory_space<vmem>>, %arg6: memref<16x128xf32, #tpu.memory_space<vmem>>) attributes {dimension_semantics = [#tpu.dimension_semantics<parallel>], iteration_bounds = array<i64: 2>, scalar_prefetch = 0 : i64, scratch_operands = 0 : i64, tpu.core_type = #tpu.core_type<tc>, window_params = [{transform_indices = @transform_0, window_bounds = array<i64: 16, 128>}, {pipeline_mode = #tpu.pipeline_mode<synchronous>, transform_indices = @transform_1, window_bounds = array<i64: 128, 128>}, {pipeline_mode = #tpu.pipeline_mode<synchronous>, transform_indices = @transform_2, window_bounds = array<i64: 1, 128>}, {pipeline_mode = #tpu.pipeline_mode<synchronous>, transform_indices = @transform_3, window_bounds = array<i64: 128, 128>}, {pipeline_mode = #tpu.pipeline_mode<synchronous>, transform_indices = @transform_4, window_bounds = array<i64: 1, 128>}, {transform_indices = @transform_5, window_bounds = array<i64: 16, 128>}]} {
    %c0 = arith.constant 0 : index
    %c0_0 = arith.constant 0 : index
    %0 = vector.load %arg1[%c0, %c0_0] : memref<16x128xf32, #tpu.memory_space<vmem>>, vector<16x128xf32>
    %c0_1 = arith.constant 0 : index
    %c0_2 = arith.constant 0 : index
    %1 = vector.load %arg2[%c0_1, %c0_2] : memref<128x128xf32, #tpu.memory_space<vmem>>, vector<128x128xf32>
    %cst = arith.constant dense<0.000000e+00> : vector<16x128xf32>
    %2 = tpu.matmul %0, %1, %cst {dimension_numbers = #tpu.dot_dimension_numbers<[1], [0], [0], [1], [0, 0, 1, 1], [], []>} : vector<16x128xf32>, vector<128x128xf32>, vector<16x128xf32> -> vector<16x128xf32>
    %c0_3 = arith.constant 0 : index
    %c0_4 = arith.constant 0 : index
    %3 = vector.load %arg3[%c0_3, %c0_4] : memref<1x128xf32, #tpu.memory_space<vmem>>, vector<1x128xf32>
    %4 = vector.broadcast %3 : vector<1x128xf32> to vector<16x128xf32>
    %5 = arith.addf %2, %4 : vector<16x128xf32>
    %cst_5 = arith.constant 0.000000e+00 : f32
    %6 = vector.broadcast %cst_5 : f32 to vector<16x128xf32>
    %7 = arith.maximumf %5, %6 : vector<16x128xf32>
    %c0_6 = arith.constant 0 : index
    %c0_7 = arith.constant 0 : index
    %8 = vector.load %arg4[%c0_6, %c0_7] : memref<128x128xf32, #tpu.memory_space<vmem>>, vector<128x128xf32>
    %cst_8 = arith.constant dense<0.000000e+00> : vector<16x128xf32>
    %9 = tpu.matmul %7, %8, %cst_8 {dimension_numbers = #tpu.dot_dimension_numbers<[1], [0], [0], [1], [0, 0, 1, 1], [], []>} : vector<16x128xf32>, vector<128x128xf32>, vector<16x128xf32> -> vector<16x128xf32>
    %c0_9 = arith.constant 0 : index
    %c0_10 = arith.constant 0 : index
    %10 = vector.load %arg5[%c0_9, %c0_10] : memref<1x128xf32, #tpu.memory_space<vmem>>, vector<1x128xf32>
    %11 = vector.broadcast %10 : vector<1x128xf32> to vector<16x128xf32>
    %12 = arith.addf %9, %11 : vector<16x128xf32>
    %c0_11 = arith.constant 0 : index
    %c0_12 = arith.constant 0 : index
    %13 = vector.load %arg6[%c0_11, %c0_12] : memref<16x128xf32, #tpu.memory_space<vmem>>, vector<16x128xf32>
    tpu.vector_store %arg6[%c0_11, %c0_12], %12 {strides = array<i32>} : memref<16x128xf32, #tpu.memory_space<vmem>>, vector<16x128xf32>,
    return
  }
  func.func @transform_0(%arg0: i32) -> (i32, i32) {
    %c0_i32 = arith.constant 0 : i32
    %c0_i32_0 = arith.constant 0 : i32
    return %arg0, %c0_i32 : i32, i32
  }
  func.func @transform_1(%arg0: i32) -> (i32, i32) {
    %c0_i32 = arith.constant 0 : i32
    %c0_i32_0 = arith.constant 0 : i32
    %c0_i32_1 = arith.constant 0 : i32
    return %c0_i32, %c0_i32_0 : i32, i32
  }
  func.func @transform_2(%arg0: i32) -> (i32, i32) {
    %c0_i32 = arith.constant 0 : i32
    %c0_i32_0 = arith.constant 0 : i32
    %c0_i32_1 = arith.constant 0 : i32
    return %c0_i32, %c0_i32_0 : i32, i32
  }
  func.func @transform_3(%arg0: i32) -> (i32, i32) {
    %c0_i32 = arith.constant 0 : i32
    %c0_i32_0 = arith.constant 0 : i32
    %c0_i32_1 = arith.constant 0 : i32
    return %c0_i32, %c0_i32_0 : i32, i32
  }
  func.func @transform_4(%arg0: i32) -> (i32, i32) {
    %c0_i32 = arith.constant 0 : i32
    %c0_i32_0 = arith.constant 0 : i32
    %c0_i32_1 = arith.constant 0 : i32
    return %c0_i32, %c0_i32_0 : i32, i32
  }
  func.func @transform_5(%arg0: i32) -> (i32, i32) {
    %c0_i32 = arith.constant 0 : i32
    %c0_i32_0 = arith.constant 0 : i32
    return %arg0, %c0_i32 : i32, i32
  }
}

</mosaic_0001>

<llo_original>
// kernel: tpu_custom_call.1
$region0: #{tpu_custom_call.1}
  #allocation0 [shape = 'u32[]', space=smem, size = 0x4, offset = 0x4, fixed_abs, tag = 'smem constant byte address 0x4 - core index']
  #allocation1 [shape = 'u32[144,128]{1,0:T(1,128)}', space=vmem, size = 0x12000, scoped, tag = 'internal scratch']
  %s0 = inlined_call_operand.hbm [shape: f32[21,128], index: 0, kind: input, shape index: {}]
  %s1 = inlined_call_operand.hbm [shape: f32[128,128], index: 1, kind: input, shape index: {}]
  %s2 = inlined_call_operand.vmem [shape: f32[1,128], index: 2, kind: input, shape index: {}]
  %s3 = inlined_call_operand.hbm [shape: f32[128,128], index: 3, kind: input, shape index: {}]
  %s4 = inlined_call_operand.vmem [shape: f32[1,128], index: 4, kind: input, shape index: {}]
  %s5 = inlined_call_operand.hbm [shape: f32[21,128], index: 5, kind: output, shape index: {}]
  %s6 = sld [smem:[#allocation0]]
  $region65: #{tpu_custom_call.1} parent=0
    _
  %s8 = ssub.s32 1, %s6
  %s9 = scalar_select 0, %s8, %s6
  $region1: #{tpu_custom_call.1} parent=0
    #allocation2 [shape = 'u8[16384]{0}', space=vmem, size = 0x4000, scoped, tag = 'input window, operand 0']
    #allocation3 [shape = 's32[2]{0}', space=sflag, size = 0x8, scoped, tag = 'scoped memory for tpu_custom_call.1']
    #allocation4 [shape = 's32[2]{0}', space=sflag, size = 0x8, scoped, tag = 'scoped memory for tpu_custom_call.1']
    #allocation5 [shape = 'u8[65536]{0}', space=vmem, size = 0x10000, scoped, tag = 'input window, operand 1, single buffered']
    #allocation6 [shape = 's32[1]{0}', space=sflag, size = 0x4, scoped, tag = 'scoped memory for tpu_custom_call.1']
    #allocation7 [shape = 'u8[65536]{0}', space=vmem, size = 0x10000, scoped, tag = 'input window, operand 3, single buffered']
    #allocation8 [shape = 'u8[16384]{0}', space=vmem, size = 0x4000, scoped, tag = 'output window, operand 0']
    %10 = vsyncpa [#allocation3], 0
    %s11 = scalar_lea.sflag [#allocation3], 1
    %12 = vsyncpa %s11, 0
    %13 = vsyncpa [#allocation6], 0
    %14 = vsyncpa [#allocation4], 0
    %s15 = scalar_lea.sflag [#allocation4], 1
    %16 = vsyncpa %s15, 0
    loop: start=0, step=1, limit=4
    $region2: #{tpu_custom_call.1} parent=1 // loop_pre_header
      _
    $region3: #{tpu_custom_call.1} parent=1 // loop_header
      %s18 = sphi 0, %s22
      %p19 = scmp.ge.s32.totalorder %s18, 4
      %s28 = sphi 0, %s30
      %s31 = sphi 0, %s28
      %s32 = sphi 0, %s31
      %s48 = sphi 0, %s32
      %s52 = sphi 0, %s52
      %s54 = sphi 0, %s52
      %s55 = sphi 0, %s54
      %s69 = sphi 0, %s55
      %s73 = sphi 0, %s73
      %s75 = sphi 0, %s73
      %s76 = sphi 0, %s75
      %s90 = sphi 0, %s76
      %s94 = sphi 0, %s94
      %s96 = sphi 0, %s94
      %s97 = sphi 0, %s96
      %s111 = sphi 0, %s97
      %s115 = sphi 0, %s115
      %s117 = sphi 0, %s115
      %s118 = sphi 0, %s117
      %s132 = sphi 0, %s118
      %s138 = sphi 0, %s140
      %s141 = sphi 0, %s138
      %s142 = sphi 0, %s141
      %s158 = sphi 0, %s142
    $region4: #{tpu_custom_call.1} parent=1 // loop_header_branch
      %21 = sbr.rel (%p19) target = $region8
    $region5: #{tpu_custom_call.1} parent=1 // loop_body
      %s23 = ssub.s32 %s18, 1
      %s24 = ssub.s32 %s18, 2
      %s25 = sadd.s32 %s18, 1
      %s26 = ssub.s32 %s18, %s25
      %p27 = scmp.eq.s32.totalorder %s26, 0
      %s29 = sadd.s32 %s28, 1
      %s30 = scalar_select %p27, %s28, %s29
      %p33 = pneg %p27
      %p34 = scmp.eq.s32.totalorder %s18, 1
      %p35 = por %p33, %p34
      %p36 = scmp.ne.s32.totalorder %s28, %s31
      %p37 = scmp.eq.s32.totalorder %s18, 0
      %p38 = por %p36, %p37
      %p39 = scmp.ne.s32.totalorder %s28, %s31
      %p40 = scmp.eq.s32.totalorder %s23, 1
      %p41 = por %p39, %p40
      %p42 = scmp.ne.s32.totalorder %s31, %s32
      %p43 = scmp.eq.s32.totalorder %s23, 0
      %p44 = por %p42, %p43
      %p45 = scmp.ne.s32.totalorder %s31, %s32
      %p46 = scmp.eq.s32.totalorder %s24, 1
      %p47 = por %p45, %p46
      %p49 = scmp.ne.s32.totalorder %s32, %s48
      %p50 = scmp.eq.s32.totalorder %s24, 0
      %p51 = por %p49, %p50
      %s53 = sadd.s32 %s52, 1
      %p56 = scmp.eq.s32.totalorder %s18, 1
      %p57 = scmp.ne.s32.totalorder %s52, %s54
      %p58 = scmp.eq.s32.totalorder %s18, 0
      %p59 = por %p57, %p58
      %p60 = scmp.ne.s32.totalorder %s52, %s54
      %p61 = scmp.eq.s32.totalorder %s23, 1
      %p62 = por %p60, %p61
      %p63 = scmp.ne.s32.totalorder %s54, %s55
      %p64 = scmp.eq.s32.totalorder %s23, 0
      %p65 = por %p63, %p64
      %p66 = scmp.ne.s32.totalorder %s54, %s55
      %p67 = scmp.eq.s32.totalorder %s24, 1
      %p68 = por %p66, %p67
      %p70 = scmp.ne.s32.totalorder %s55, %s69
      %p71 = scmp.eq.s32.totalorder %s24, 0
      %p72 = por %p70, %p71
      %s74 = sadd.s32 %s73, 1
      %p77 = scmp.eq.s32.totalorder %s18, 1
      %p78 = scmp.ne.s32.totalorder %s73, %s75
      %p79 = scmp.eq.s32.totalorder %s18, 0
      %p80 = por %p78, %p79
      %p81 = scmp.ne.s32.totalorder %s73, %s75
      %p82 = scmp.eq.s32.totalorder %s23, 1
      %p83 = por %p81, %p82
      %p84 = scmp.ne.s32.totalorder %s75, %s76
      %p85 = scmp.eq.s32.totalorder %s23, 0
      %p86 = por %p84, %p85
      %p87 = scmp.ne.s32.totalorder %s75, %s76
      %p88 = scmp.eq.s32.totalorder %s24, 1
      %p89 = por %p87, %p88
      %p91 = scmp.ne.s32.totalorder %s76, %s90
      %p92 = scmp.eq.s32.totalorder %s24, 0
      %p93 = por %p91, %p92
      %s95 = sadd.s32 %s94, 1
      %p98 = scmp.eq.s32.totalorder %s18, 1
      %p99 = scmp.ne.s32.totalorder %s94, %s96
      %p100 = scmp.eq.s32.totalorder %s18, 0
      %p101 = por %p99, %p100
      %p102 = scmp.ne.s32.totalorder %s94, %s96
      %p103 = scmp.eq.s32.totalorder %s23, 1
      %p104 = por %p102, %p103
      %p105 = scmp.ne.s32.totalorder %s96, %s97
      %p106 = scmp.eq.s32.totalorder %s23, 0
      %p107 = por %p105, %p106
      %p108 = scmp.ne.s32.totalorder %s96, %s97
      %p109 = scmp.eq.s32.totalorder %s24, 1
      %p110 = por %p108, %p109
      %p112 = scmp.ne.s32.totalorder %s97, %s111
      %p113 = scmp.eq.s32.totalorder %s24, 0
      %p114 = por %p112, %p113
      %s116 = sadd.s32 %s115, 1
      %p119 = scmp.eq.s32.totalorder %s18, 1
      %p120 = scmp.ne.s32.totalorder %s115, %s117
      %p121 = scmp.eq.s32.totalorder %s18, 0
      %p122 = por %p120, %p121
      %p123 = scmp.ne.s32.totalorder %s115, %s117
      %p124 = scmp.eq.s32.totalorder %s23, 1
      %p125 = por %p123, %p124
      %p126 = scmp.ne.s32.totalorder %s117, %s118
      %p127 = scmp.eq.s32.totalorder %s23, 0
      %p128 = por %p126, %p127
      %p129 = scmp.ne.s32.totalorder %s117, %s118
      %p130 = scmp.eq.s32.totalorder %s24, 1
      %p131 = por %p129, %p130
      %p133 = scmp.ne.s32.totalorder %s118, %s132
      %p134 = scmp.eq.s32.totalorder %s24, 0
      %p135 = por %p133, %p134
      %s136 = ssub.s32 %s18, %s25
      %p137 = scmp.eq.s32.totalorder %s136, 0
      %s139 = sadd.s32 %s138, 1
      %s140 = scalar_select %p137, %s138, %s139
      %p143 = pneg %p137
      %p144 = scmp.eq.s32.totalorder %s18, 1
      %p145 = por %p143, %p144
      %p146 = scmp.ne.s32.totalorder %s138, %s141
      %p147 = scmp.eq.s32.totalorder %s18, 0
      %p148 = por %p146, %p147
      %p149 = scmp.ne.s32.totalorder %s138, %s141
      %p150 = scmp.eq.s32.totalorder %s23, 1
      %p151 = por %p149, %p150
      %p152 = scmp.ne.s32.totalorder %s141, %s142
      %p153 = scmp.eq.s32.totalorder %s23, 0
      %p154 = por %p152, %p153
      %p155 = scmp.ne.s32.totalorder %s141, %s142
      %p156 = scmp.eq.s32.totalorder %s24, 1
      %p157 = por %p155, %p156
      %p159 = scmp.ne.s32.totalorder %s142, %s158
      %p160 = scmp.eq.s32.totalorder %s24, 0
      %p161 = por %p159, %p160
      %p162 = scmp.le.s32.totalorder 1, %s18
      %p163 = scmp.lt.s32.totalorder %s18, 3
      %p164 = pnand %p162, %p163
      %p165 = pneg %p164
      // Predicated region
      $region9: #{tpu_custom_call.1} parent=5 // pred_check
        _
      $region10: #{tpu_custom_call.1} parent=5 // pred_check_branch
        %167 = sbr.rel (%p164) target = $region12
      $region11: #{tpu_custom_call.1} parent=5 // pred_region
        %s168 = ssub.s32 %s18, 1
        // Predicated region
        $region13: #{tpu_custom_call.1} parent=11 // pred_check
          %p169 = pneg %p65
        $region14: #{tpu_custom_call.1} parent=11 // pred_check_branch
          %171 = sbr.rel (%p169) target = $region16
        $region15: #{tpu_custom_call.1} parent=11 // pred_region
          %s173 = ssub.s32 2048, 2048
          %174 = vsyncadd [#allocation6], %s173
          %s175 = sshll.u32 [#allocation5], 4
          %s176 = int_to_ptr.vmem [resolvable:$true] %s175
          %181 = dma.hbm_to_vmem [thread:$0]  %s1, 2048, %s176, [#allocation6], 128, 128, 8
        $region16: #{tpu_custom_call.1} parent=11 // pred_fallthru
          _
        // Predicated region
        $region17: #{tpu_custom_call.1} parent=11 // pred_check
          %p182 = pneg %p86
        $region18: #{tpu_custom_call.1} parent=11 // pred_check_branch
          %184 = sbr.rel (%p182) target = $region20
        $region19: #{tpu_custom_call.1} parent=11 // pred_region
          _
        $region20: #{tpu_custom_call.1} parent=11 // pred_fallthru
          _
        // Predicated region
        $region21: #{tpu_custom_call.1} parent=11 // pred_check
          %p185 = pneg %p107
        $region22: #{tpu_custom_call.1} parent=11 // pred_check_branch
          %187 = sbr.rel (%p185) target = $region24
        $region23: #{tpu_custom_call.1} parent=11 // pred_region
          %s189 = ssub.s32 2048, 2048
          %190 = vsyncadd [#allocation6], %s189
          %s191 = sshll.u32 [#allocation7], 4
          %s192 = int_to_ptr.vmem [resolvable:$true] %s191
          %197 = dma.hbm_to_vmem [thread:$0]  %s3, 2048, %s192, [#allocation6], 128, 128, 8
        $region24: #{tpu_custom_call.1} parent=11 // pred_fallthru
          _
        // Predicated region
        $region25: #{tpu_custom_call.1} parent=11 // pred_check
          %p198 = pneg %p128
        $region26: #{tpu_custom_call.1} parent=11 // pred_check_branch
          %200 = sbr.rel (%p198) target = $region28
        $region27: #{tpu_custom_call.1} parent=11 // pred_region
          _
        $region28: #{tpu_custom_call.1} parent=11 // pred_fallthru
          _
      $region12: #{tpu_custom_call.1} parent=5 // pred_fallthru
        _
      %p201 = scmp.lt.s32.totalorder %s18, 2
      // Predicated region
      $region29: #{tpu_custom_call.1} parent=5 // pred_check
        %p202 = pneg %p201
      $region30: #{tpu_custom_call.1} parent=5 // pred_check_branch
        %204 = sbr.rel (%p202) target = $region32
      $region31: #{tpu_custom_call.1} parent=5 // pred_region
        // Predicated region
        $region33: #{tpu_custom_call.1} parent=31 // pred_check
          %p205 = pneg %p38
        $region34: #{tpu_custom_call.1} parent=31 // pred_check_branch
          %207 = sbr.rel (%p205) target = $region36
        $region35: #{tpu_custom_call.1} parent=31 // pred_region
          %s208 = sand.u32 %s28, 1
          %s209 = scalar_lea.sflag [#allocation3], %s208
          %s210 = sand.u32 %s28, 1
          %s211 = smul.addr %s210, 16
          %s212 = scalar_lea.vmem [#allocation2], %s211
          %s213 = smul.u32 2, %s18
          %s214 = ssub.s32 3, %s213
          %p215 = scmp.lt.s32.totalorder %s214, 2
          %s216 = scalar_select %p215, %s214, 2
          %s217 = smul.u32 128, %s216
          %s219 = ssub.s32 256, %s217
          %220 = vsyncadd %s209, %s219
          %p221 = scmp.ne.s32.totalorder 0, %s217
          %s222 = smul.addr %s213, 128
          %s223 = scalar_lea.hbm %s0, %s222
          %s224 = smul.u32 8, %s216
          %s225 = sshll.u32 %s212, 4
          %s226 = int_to_ptr.vmem [resolvable:$true] %s225
          %s227 = sshll.u32 %s224, 4
          %231 = dma.hbm_to_vmem [thread:$0]  (%p221), %s223, %s227, %s226, %s209, 128, 128, 8
        $region36: #{tpu_custom_call.1} parent=31 // pred_fallthru
          _
      $region32: #{tpu_custom_call.1} parent=5 // pred_fallthru
        _
      %p232 = scmp.le.s32.totalorder 1, %s18
      %p233 = scmp.lt.s32.totalorder %s18, 3
      %p234 = pnand %p232, %p233
      %p235 = pneg %p234
      // Predicated region
      $region37: #{tpu_custom_call.1} parent=5 // pred_check
        _
      $region38: #{tpu_custom_call.1} parent=5 // pred_check_branch
        %237 = sbr.rel (%p234) target = $region40
      $region39: #{tpu_custom_call.1} parent=5 // pred_region
        %s238 = ssub.s32 %s18, 1
        %s239 = sand.u32 %s31, 1
        %s240 = scalar_lea.sflag [#allocation3], %s239
        %s241 = sand.u32 %s31, 1
        %s242 = smul.addr %s241, 16
        %s243 = scalar_lea.vmem [#allocation2], %s242
        // Predicated region
        $region41: #{tpu_custom_call.1} parent=39 // pred_check
          %p244 = pneg %p44
        $region42: #{tpu_custom_call.1} parent=39 // pred_check_branch
          %246 = sbr.rel (%p244) target = $region44
        $region43: #{tpu_custom_call.1} parent=39 // pred_region
          %247 = dma.done %s240, 256
        $region44: #{tpu_custom_call.1} parent=39 // pred_fallthru
          _
        // Predicated region
        $region45: #{tpu_custom_call.1} parent=39 // pred_check
          %p248 = pneg %p65
        $region46: #{tpu_custom_call.1} parent=39 // pred_check_branch
          %250 = sbr.rel (%p248) target = $region48
        $region47: #{tpu_custom_call.1} parent=39 // pred_region
          %251 = dma.done [#allocation6], 2048
        $region48: #{tpu_custom_call.1} parent=39 // pred_fallthru
          _
        // Predicated region
        $region49: #{tpu_custom_call.1} parent=39 // pred_check
          %p252 = pneg %p107
        $region50: #{tpu_custom_call.1} parent=39 // pred_check_branch
          %254 = sbr.rel (%p252) target = $region52
        $region51: #{tpu_custom_call.1} parent=39 // pred_region
          %255 = dma.done [#allocation6], 2048
        $region52: #{tpu_custom_call.1} parent=39 // pred_fallthru
          _
        %s256 = sand.u32 %s31, 1
        %s257 = scalar_lea.sflag [#allocation3], %s256
        %s258 = sand.u32 %s31, 1
        %s259 = smul.addr %s258, 16
        %s260 = scalar_lea.vmem [#allocation2], %s259
        %p261 = pneg %p44
        %p262 = pneg %p41
        %p263 = pneg %p65
        %p264 = pneg %p62
        %p265 = pneg %p86
        %p266 = pneg %p83
        %p267 = pneg %p107
        %p268 = pneg %p104
        %p269 = pneg %p128
        %p270 = pneg %p125
        %p271 = pneg %p154
        %p272 = pneg %p151
        %s273 = sand.u32 %s141, 1
        %s274 = scalar_lea.sflag [#allocation4], %s273
        %s275 = sand.u32 %s141, 1
        %s276 = smul.addr %s275, 16
        %s277 = scalar_lea.vmem [#allocation8], %s276
        %s278 = smul.u32 2, %s23
        %s279 = ssub.s32 3, %s278
        %p280 = scmp.lt.s32.totalorder %s279, 2
        %s281 = scalar_select %p280, %s279, 2
        %s282 = smul.u32 128, %s281
        %s283 = smul.u32 2, %s23
        %s284 = ssub.s32 3, %s283
        %p285 = scmp.lt.s32.totalorder %s284, 2
        %s286 = scalar_select %p285, %s284, 2
        %s287 = smul.u32 128, %s286
        %v288 = vld [vmem:[%s243] sm:$0xff]
        %v289 = vld [vmem:[%s243 + $0x8] sm:$0xff]
        %v290 = vld [vmem:[#allocation5] sm:$0xff]
        %v291 = vld [vmem:[#allocation5 + $0x8] sm:$0xff]
        %v292 = vld [vmem:[#allocation5 + $0x10] sm:$0xff]
        %v293 = vld [vmem:[#allocation5 + $0x18] sm:$0xff]
        %v294 = vld [vmem:[#allocation5 + $0x20] sm:$0xff]
        %v295 = vld [vmem:[#allocation5 + $0x28] sm:$0xff]
        %v296 = vld [vmem:[#allocation5 + $0x30] sm:$0xff]
        %v297 = vld [vmem:[#allocation5 + $0x38] sm:$0xff]
        %v298 = vld [vmem:[#allocation5 + $0x40] sm:$0xff]
        %v299 = vld [vmem:[#allocation5 + $0x48] sm:$0xff]
        %v300 = vld [vmem:[#allocation5 + $0x50] sm:$0xff]
        %v301 = vld [vmem:[#allocation5 + $0x58] sm:$0xff]
        %v302 = vld [vmem:[#allocation5 + $0x60] sm:$0xff]
        %v303 = vld [vmem:[#allocation5 + $0x68] sm:$0xff]
        %v304 = vld [vmem:[#allocation5 + $0x70] sm:$0xff]
        %v305 = vld [vmem:[#allocation5 + $0x78] sm:$0xff]
        %v306 = vld [vmem:[%s2] sm:$0x1]
        %v308 = vlaneseq
        %v309 = vshrl.u32 %v308, 7
        %v310 = vsub.s32 0, %v309
        %v311 = vrot.slane %v306, %v310
        %313 = vmatprep.subr.mxu0 0.0
        %314 = vmatpush1.msra.mxu0 %v305
        %315 = vmatprep.subr.mxu0 0.0
        %316 = vmatpush1.msra.mxu0 %v304
        %317 = vmatprep.subr.mxu0 0.0
        %318 = vmatpush1.msra.mxu0 %v303
        %319 = vmatprep.subr.mxu0 0.0
        %320 = vmatpush1.msra.mxu0 %v302
        %321 = vmatprep.subr.mxu0 0.0
        %322 = vmatpush1.msra.mxu0 %v301
        %323 = vmatprep.subr.mxu0 0.0
        %324 = vmatpush1.msra.mxu0 %v300
        %325 = vmatprep.subr.mxu0 0.0
        %326 = vmatpush1.msra.mxu0 %v299
        %327 = vmatprep.subr.mxu0 0.0
        %328 = vmatpush1.msra.mxu0 %v298
        %329 = vmatprep.subr.mxu0 0.0
        %330 = vmatpush1.msra.mxu0 %v297
        %331 = vmatprep.subr.mxu0 0.0
        %332 = vmatpush1.msra.mxu0 %v296
        %333 = vmatprep.subr.mxu0 0.0
        %334 = vmatpush1.msra.mxu0 %v295
        %335 = vmatprep.subr.mxu0 0.0
        %336 = vmatpush1.msra.mxu0 %v294
        %337 = vmatprep.subr.mxu0 0.0
        %338 = vmatpush1.msra.mxu0 %v293
        %339 = vmatprep.subr.mxu0 0.0
        %340 = vmatpush1.msra.mxu0 %v292
        %341 = vmatprep.subr.mxu0 0.0
        %342 = vmatpush1.msra.mxu0 %v291
        %343 = vmatprep.subr.mxu0 0.0
        %344 = vmatpush1.msra.mxu0 %v290
        %345 = vmatprep.subr.mxu0 0.0
        %346 = vmatpush2.msra.mxu0 0.0
        %347 = vmatprep.subr.mxu0 0.0
        %348 = vmatpush2.msra.mxu0 0.0
        %349 = vmatprep.subr.mxu0 0.0
        %350 = vmatpush2.msra.mxu0 0.0
        %351 = vmatprep.subr.mxu0 0.0
        %352 = vmatpush2.msra.mxu0 0.0
        %353 = vmatprep.subr.mxu0 0.0
        %354 = vmatpush2.msra.mxu0 0.0
        %355 = vmatprep.subr.mxu0 0.0
        %356 = vmatpush2.msra.mxu0 0.0
        %357 = vmatprep.subr.mxu0 0.0
        %358 = vmatpush2.msra.mxu0 0.0
        %359 = vmatprep.subr.mxu0 0.0
        %360 = vmatpush2.msra.mxu0 0.0
        %361 = vmatprep.subr.mxu0 0.0
        %362 = vmatpush2.msra.mxu0 0.0
        %363 = vmatprep.subr.mxu0 0.0
        %364 = vmatpush2.msra.mxu0 0.0
        %365 = vmatprep.subr.mxu0 0.0
        %366 = vmatpush2.msra.mxu0 0.0
        %367 = vmatprep.subr.mxu0 0.0
        %368 = vmatpush2.msra.mxu0 0.0
        %369 = vmatprep.subr.mxu0 0.0
        %370 = vmatpush2.msra.mxu0 0.0
        %371 = vmatprep.subr.mxu0 0.0
        %372 = vmatpush2.msra.mxu0 0.0
        %373 = vmatprep.subr.mxu0 0.0
        %374 = vmatpush2.msra.mxu0 0.0
        %375 = vmatprep.subr.mxu0 0.0
        %376 = vmatpush2.msra.mxu0 0.0
        %377 = vmatprep.mubr.f32.mxu0 0.0
        %378 = vmatmul.mubr.f32.gmra.mxu0 %v288
        %v379 = vpop.f32.mrf.mxu0
        %v380 = vadd.f32 %v311, %v379
        %v381 = vpop.f32.mrf.mxu0
        %382 = vmatprep.mubr.f32.mxu0 0.0
        %383 = vmatmul.mubr.f32.gmra.mxu0 %v289
        %v384 = vpop.f32.mrf.mxu0
        %v385 = vadd.f32 %v311, %v384
        %v386 = vpop.f32.mrf.mxu0
        %387 = vdwg.mxu0
        %v388 = vmax.f32 %v380, 0.0
        %v389 = vmax.f32 %v385, 0.0
        %v390 = vld [vmem:[#allocation7] sm:$0xff]
        %v391 = vld [vmem:[#allocation7 + $0x8] sm:$0xff]
        %v392 = vld [vmem:[#allocation7 + $0x10] sm:$0xff]
        %v393 = vld [vmem:[#allocation7 + $0x18] sm:$0xff]
        %v394 = vld [vmem:[#allocation7 + $0x20] sm:$0xff]
        %v395 = vld [vmem:[#allocation7 + $0x28] sm:$0xff]
        %v396 = vld [vmem:[#allocation7 + $0x30] sm:$0xff]
        %v397 = vld [vmem:[#allocation7 + $0x38] sm:$0xff]
        %v398 = vld [vmem:[#allocation7 + $0x40] sm:$0xff]
        %v399 = vld [vmem:[#allocation7 + $0x48] sm:$0xff]
        %v400 = vld [vmem:[#allocation7 + $0x50] sm:$0xff]
        %v401 = vld [vmem:[#allocation7 + $0x58] sm:$0xff]
        %v402 = vld [vmem:[#allocation7 + $0x60] sm:$0xff]
        %v403 = vld [vmem:[#allocation7 + $0x68] sm:$0xff]
        %v404 = vld [vmem:[#allocation7 + $0x70] sm:$0xff]
        %v405 = vld [vmem:[#allocation7 + $0x78] sm:$0xff]
        %v406 = vld [vmem:[%s4] sm:$0x1]
        %v408 = vlaneseq
        %v409 = vshrl.u32 %v408, 7
        %v410 = vsub.s32 0, %v409
        %v411 = vrot.slane %v406, %v410
        %413 = vmatprep.subr.mxu0 0.0
        %414 = vmatpush1.msra.mxu0 %v405
        %415 = vmatprep.subr.mxu0 0.0
        %416 = vmatpush1.msra.mxu0 %v404
        %417 = vmatprep.subr.mxu0 0.0
        %418 = vmatpush1.msra.mxu0 %v403
        %419 = vmatprep.subr.mxu0 0.0
        %420 = vmatpush1.msra.mxu0 %v402
        %421 = vmatprep.subr.mxu0 0.0
        %422 = vmatpush1.msra.mxu0 %v401
        %423 = vmatprep.subr.mxu0 0.0
        %424 = vmatpush1.msra.mxu0 %v400
        %425 = vmatprep.subr.mxu0 0.0
        %426 = vmatpush1.msra.mxu0 %v399
        %427 = vmatprep.subr.mxu0 0.0
        %428 = vmatpush1.msra.mxu0 %v398
        %429 = vmatprep.subr.mxu0 0.0
        %430 = vmatpush1.msra.mxu0 %v397
        %431 = vmatprep.subr.mxu0 0.0
        %432 = vmatpush1.msra.mxu0 %v396
        %433 = vmatprep.subr.mxu0 0.0
        %434 = vmatpush1.msra.mxu0 %v395
        %435 = vmatprep.subr.mxu0 0.0
        %436 = vmatpush1.msra.mxu0 %v394
        %437 = vmatprep.subr.mxu0 0.0
        %438 = vmatpush1.msra.mxu0 %v393
        %439 = vmatprep.subr.mxu0 0.0
        %440 = vmatpush1.msra.mxu0 %v392
        %441 = vmatprep.subr.mxu0 0.0
        %442 = vmatpush1.msra.mxu0 %v391
        %443 = vmatprep.subr.mxu0 0.0
        %444 = vmatpush1.msra.mxu0 %v390
        %445 = vmatprep.subr.mxu0 0.0
        %446 = vmatpush2.msra.mxu0 0.0
        %447 = vmatprep.subr.mxu0 0.0
        %448 = vmatpush2.msra.mxu0 0.0
        %449 = vmatprep.subr.mxu0 0.0
        %450 = vmatpush2.msra.mxu0 0.0
        %451 = vmatprep.subr.mxu0 0.0
        %452 = vmatpush2.msra.mxu0 0.0
        %453 = vmatprep.subr.mxu0 0.0
        %454 = vmatpush2.msra.mxu0 0.0
        %455 = vmatprep.subr.mxu0 0.0
        %456 = vmatpush2.msra.mxu0 0.0
        %457 = vmatprep.subr.mxu0 0.0
        %458 = vmatpush2.msra.mxu0 0.0
        %459 = vmatprep.subr.mxu0 0.0
        %460 = vmatpush2.msra.mxu0 0.0
        %461 = vmatprep.subr.mxu0 0.0
        %462 = vmatpush2.msra.mxu0 0.0
        %463 = vmatprep.subr.mxu0 0.0
        %464 = vmatpush2.msra.mxu0 0.0
        %465 = vmatprep.subr.mxu0 0.0
        %466 = vmatpush2.msra.mxu0 0.0
        %467 = vmatprep.subr.mxu0 0.0
        %468 = vmatpush2.msra.mxu0 0.0
        %469 = vmatprep.subr.mxu0 0.0
        %470 = vmatpush2.msra.mxu0 0.0
        %471 = vmatprep.subr.mxu0 0.0
        %472 = vmatpush2.msra.mxu0 0.0
        %473 = vmatprep.subr.mxu0 0.0
        %474 = vmatpush2.msra.mxu0 0.0
        %475 = vmatprep.subr.mxu0 0.0
        %476 = vmatpush2.msra.mxu0 0.0
        %477 = vmatprep.mubr.f32.mxu0 0.0
        %478 = vmatmul.mubr.f32.gmra.mxu0 %v388
        %v479 = vpop.f32.mrf.mxu0
        %v480 = vadd.f32 %v411, %v479
        %v481 = vpop.f32.mrf.mxu0
        %482 = vmatprep.mubr.f32.mxu0 0.0
        %483 = vmatmul.mubr.f32.gmra.mxu0 %v389
        %v484 = vpop.f32.mrf.mxu0
        %v485 = vadd.f32 %v411, %v484
        %v486 = vpop.f32.mrf.mxu0
        %487 = vdwg.mxu0
        %488 = vst [vmem:[%s277] sm:$0xff] %v480
        %489 = vst [vmem:[%s277 + $0x8] sm:$0xff] %v485
        %s490 = sand.u32 %s141, 1
        %s491 = scalar_lea.sflag [#allocation4], %s490
        %s492 = sand.u32 %s141, 1
        %s493 = smul.addr %s492, 16
        %s494 = scalar_lea.vmem [#allocation8], %s493
        // Predicated region
        $region53: #{tpu_custom_call.1} parent=39 // pred_check
          %p495 = pneg %p151
        $region54: #{tpu_custom_call.1} parent=39 // pred_check_branch
          %497 = sbr.rel (%p495) target = $region56
        $region55: #{tpu_custom_call.1} parent=39 // pred_region
          %s498 = smul.u32 2, %s23
          %s499 = ssub.s32 3, %s498
          %p500 = scmp.lt.s32.totalorder %s499, 2
          %s501 = scalar_select %p500, %s499, 2
          %s502 = smul.u32 128, %s501
          %s504 = ssub.s32 256, %s502
          %505 = vsyncadd %s491, %s504
          %p506 = scmp.ne.s32.totalorder 0, %s502
          %s507 = smul.addr %s498, 128
          %s508 = scalar_lea.hbm %s5, %s507
          %s509 = smul.u32 8, %s501
          %s510 = sshll.u32 %s494, 4
          %s511 = int_to_ptr.vmem [resolvable:$true] %s510
          %s512 = sshll.u32 %s509, 4
          %516 = dma.vmem_to_hbm [thread:$0]  (%p506), %s511, %s512, %s508, %s491, 128, 128, 8
        $region56: #{tpu_custom_call.1} parent=39 // pred_fallthru
          _
      $region40: #{tpu_custom_call.1} parent=5 // pred_fallthru
        _
      %p517 = scmp.le.s32.totalorder 2, %s18
      // Predicated region
      $region57: #{tpu_custom_call.1} parent=5 // pred_check
        %p518 = pneg %p517
      $region58: #{tpu_custom_call.1} parent=5 // pred_check_branch
        %520 = sbr.rel (%p518) target = $region60
      $region59: #{tpu_custom_call.1} parent=5 // pred_region
        %s521 = ssub.s32 %s18, 2
        // Predicated region
        $region61: #{tpu_custom_call.1} parent=59 // pred_check
          %p522 = pneg %p157
        $region62: #{tpu_custom_call.1} parent=59 // pred_check_branch
          %524 = sbr.rel (%p522) target = $region64
        $region63: #{tpu_custom_call.1} parent=59 // pred_region
          %s525 = sand.u32 %s142, 1
          %s526 = scalar_lea.sflag [#allocation4], %s525
          %s527 = sand.u32 %s142, 1
          %s528 = smul.addr %s527, 16
          %s529 = scalar_lea.vmem [#allocation8], %s528
          %530 = dma.done %s526, 256
        $region64: #{tpu_custom_call.1} parent=59 // pred_fallthru
          _
      $region60: #{tpu_custom_call.1} parent=5 // pred_fallthru
        _
    $region6: #{tpu_custom_call.1} parent=1 // loop_footer
      %s22 = sadd.s32 1, %s18
    $region7: #{tpu_custom_call.1} parent=1 // loop_footer_branch
      %17 = sbr.rel target = $region3
    $region8: #{tpu_custom_call.1} parent=1 // loop_exit
      _
    %531 = vsyncpa [#allocation3], 1
    %s532 = scalar_lea.sflag [#allocation3], 1
    %533 = vsyncpa %s532, 1
    %534 = vsyncpa [#allocation6], 1
    %535 = vsyncpa [#allocation4], 1
    %s536 = scalar_lea.sflag [#allocation4], 1
    %537 = vsyncpa %s536, 1

// kernel: tpu_custom_call.1
$region0: #{tpu_custom_call.1}
  #allocation0 [shape = 'u32[]', space=smem, size = 0x4, offset = 0x4, fixed_abs, tag = 'smem constant byte address 0x4 - core index']
  #allocation1 [shape = 'u32[144,128]{1,0:T(1,128)}', space=vmem, size = 0x12000, scoped, tag = 'internal scratch']
  %s0 = inlined_call_operand.hbm [shape: f32[21,128], index: 0, kind: input, shape index: {}]
  %s1 = inlined_call_operand.hbm [shape: f32[128,128], index: 1, kind: input, shape index: {}]
  %s2 = inlined_call_operand.vmem [shape: f32[1,128], index: 2, kind: input, shape index: {}]
  %s3 = inlined_call_operand.hbm [shape: f32[128,128], index: 3, kind: input, shape index: {}]
  %s4 = inlined_call_operand.vmem [shape: f32[1,128], index: 4, kind: input, shape index: {}]
  %s5 = inlined_call_operand.hbm [shape: f32[21,128], index: 5, kind: output, shape index: {}]
  %s6 = sld [smem:[#allocation0]]
  $region65: #{tpu_custom_call.1} parent=0
    _
  %s8 = ssub.s32 1, %s6
  %s9 = scalar_select 0, %s8, %s6
  $region1: #{tpu_custom_call.1} parent=0
    #allocation2 [shape = 'u8[16384]{0}', space=vmem, size = 0x4000, scoped, tag = 'input window, operand 0']
    #allocation3 [shape = 's32[2]{0}', space=sflag, size = 0x8, scoped, tag = 'scoped memory for tpu_custom_call.1']
    #allocation4 [shape = 's32[2]{0}', space=sflag, size = 0x8, scoped, tag = 'scoped memory for tpu_custom_call.1']
    #allocation5 [shape = 'u8[65536]{0}', space=vmem, size = 0x10000, scoped, tag = 'input window, operand 1, single buffered']
    #allocation6 [shape = 's32[1]{0}', space=sflag, size = 0x4, scoped, tag = 'scoped memory for tpu_custom_call.1']
    #allocation7 [shape = 'u8[65536]{0}', space=vmem, size = 0x10000, scoped, tag = 'input window, operand 3, single buffered']
    #allocation8 [shape = 'u8[16384]{0}', space=vmem, size = 0x4000, scoped, tag = 'output window, operand 0']
    %10 = vsyncpa [#allocation3], 0
    %s11 = scalar_lea.sflag [#allocation3], 1
    %12 = vsyncpa %s11, 0
    %13 = vsyncpa [#allocation6], 0
    %14 = vsyncpa [#allocation4], 0
    %s15 = scalar_lea.sflag [#allocation4], 1
    %16 = vsyncpa %s15, 0
    loop: start=0, step=1, limit=4
    $region2: #{tpu_custom_call.1} parent=1 // loop_pre_header
      _
    $region3: #{tpu_custom_call.1} parent=1 // loop_header
      %s18 = sphi 0, %s22
      %p19 = scmp.ge.s32.totalorder %s18, 4
      %s28 = sphi 0, %s30
      %s31 = sphi 0, %s28
      %s32 = sphi 0, %s31
      %s48 = sphi 0, %s32
      %s52 = sphi 0, %s52
      %s54 = sphi 0, %s52
      %s55 = sphi 0, %s54
      %s69 = sphi 0, %s55
      %s73 = sphi 0, %s73
      %s75 = sphi 0, %s73
      %s76 = sphi 0, %s75
      %s90 = sphi 0, %s76
      %s94 = sphi 0, %s94
      %s96 = sphi 0, %s94
      %s97 = sphi 0, %s96
      %s111 = sphi 0, %s97
      %s115 = sphi 0, %s115
      %s117 = sphi 0, %s115
      %s118 = sphi 0, %s117
      %s132 = sphi 0, %s118
      %s138 = sphi 0, %s140
      %s141 = sphi 0, %s138
      %s142 = sphi 0, %s141
      %s158 = sphi 0, %s142
    $region4: #{tpu_custom_call.1} parent=1 // loop_header_branch
      %21 = sbr.rel (%p19) target = $region8
    $region5: #{tpu_custom_call.1} parent=1 // loop_body
      %s23 = ssub.s32 %s18, 1
      %s24 = ssub.s32 %s18, 2
      %s25 = sadd.s32 %s18, 1
      %s26 = ssub.s32 %s18, %s25
      %p27 = scmp.eq.s32.totalorder %s26, 0
      %s29 = sadd.s32 %s28, 1
      %s30 = scalar_select %p27, %s28, %s29
      %p33 = pneg %p27
      %p34 = scmp.eq.s32.totalorder %s18, 1
      %p35 = por %p33, %p34
      %p36 = scmp.ne.s32.totalorder %s28, %s31
      %p37 = scmp.eq.s32.totalorder %s18, 0
      %p38 = por %p36, %p37
      %p39 = scmp.ne.s32.totalorder %s28, %s31
      %p40 = scmp.eq.s32.totalorder %s23, 1
      %p41 = por %p39, %p40
      %p42 = scmp.ne.s32.totalorder %s31, %s32
      %p43 = scmp.eq.s32.totalorder %s23, 0
      %p44 = por %p42, %p43
      %p45 = scmp.ne.s32.totalorder %s31, %s32
      %p46 = scmp.eq.s32.totalorder %s24, 1
      %p47 = por %p45, %p46
      %p49 = scmp.ne.s32.totalorder %s32, %s48
      %p50 = scmp.eq.s32.totalorder %s24, 0
      %p51 = por %p49, %p50
      %s53 = sadd.s32 %s52, 1
      %p56 = scmp.eq.s32.totalorder %s18, 1
      %p57 = scmp.ne.s32.totalorder %s52, %s54
      %p58 = scmp.eq.s32.totalorder %s18, 0
      %p59 = por %p57, %p58
      %p60 = scmp.ne.s32.totalorder %s52, %s54
      %p61 = scmp.eq.s32.totalorder %s23, 1
      %p62 = por %p60, %p61
      %p63 = scmp.ne.s32.totalorder %s54, %s55
      %p64 = scmp.eq.s32.totalorder %s23, 0
      %p65 = por %p63, %p64
      %p66 = scmp.ne.s32.totalorder %s54, %s55
      %p67 = scmp.eq.s32.totalorder %s24, 1
      %p68 = por %p66, %p67
      %p70 = scmp.ne.s32.totalorder %s55, %s69
      %p71 = scmp.eq.s32.totalorder %s24, 0
      %p72 = por %p70, %p71
      %s74 = sadd.s32 %s73, 1
      %p77 = scmp.eq.s32.totalorder %s18, 1
      %p78 = scmp.ne.s32.totalorder %s73, %s75
      %p79 = scmp.eq.s32.totalorder %s18, 0
      %p80 = por %p78, %p79
      %p81 = scmp.ne.s32.totalorder %s73, %s75
      %p82 = scmp.eq.s32.totalorder %s23, 1
      %p83 = por %p81, %p82
      %p84 = scmp.ne.s32.totalorder %s75, %s76
      %p85 = scmp.eq.s32.totalorder %s23, 0
      %p86 = por %p84, %p85
      %p87 = scmp.ne.s32.totalorder %s75, %s76
      %p88 = scmp.eq.s32.totalorder %s24, 1
      %p89 = por %p87, %p88
      %p91 = scmp.ne.s32.totalorder %s76, %s90
      %p92 = scmp.eq.s32.totalorder %s24, 0
      %p93 = por %p91, %p92
      %s95 = sadd.s32 %s94, 1
      %p98 = scmp.eq.s32.totalorder %s18, 1
      %p99 = scmp.ne.s32.totalorder %s94, %s96
      %p100 = scmp.eq.s32.totalorder %s18, 0
      %p101 = por %p99, %p100
      %p102 = scmp.ne.s32.totalorder %s94, %s96
      %p103 = scmp.eq.s32.totalorder %s23, 1
      %p104 = por %p102, %p103
      %p105 = scmp.ne.s32.totalorder %s96, %s97
      %p106 = scmp.eq.s32.totalorder %s23, 0
      %p107 = por %p105, %p106
      %p108 = scmp.ne.s32.totalorder %s96, %s97
      %p109 = scmp.eq.s32.totalorder %s24, 1
      %p110 = por %p108, %p109
      %p112 = scmp.ne.s32.totalorder %s97, %s111
      %p113 = scmp.eq.s32.totalorder %s24, 0
      %p114 = por %p112, %p113
      %s116 = sadd.s32 %s115, 1
      %p119 = scmp.eq.s32.totalorder %s18, 1
      %p120 = scmp.ne.s32.totalorder %s115, %s117
      %p121 = scmp.eq.s32.totalorder %s18, 0
      %p122 = por %p120, %p121
      %p123 = scmp.ne.s32.totalorder %s115, %s117
      %p124 = scmp.eq.s32.totalorder %s23, 1
      %p125 = por %p123, %p124
      %p126 = scmp.ne.s32.totalorder %s117, %s118
      %p127 = scmp.eq.s32.totalorder %s23, 0
      %p128 = por %p126, %p127
      %p129 = scmp.ne.s32.totalorder %s117, %s118
      %p130 = scmp.eq.s32.totalorder %s24, 1
      %p131 = por %p129, %p130
      %p133 = scmp.ne.s32.totalorder %s118, %s132
      %p134 = scmp.eq.s32.totalorder %s24, 0
      %p135 = por %p133, %p134
      %s136 = ssub.s32 %s18, %s25
      %p137 = scmp.eq.s32.totalorder %s136, 0
      %s139 = sadd.s32 %s138, 1
      %s140 = scalar_select %p137, %s138, %s139
      %p143 = pneg %p137
      %p144 = scmp.eq.s32.totalorder %s18, 1
      %p145 = por %p143, %p144
      %p146 = scmp.ne.s32.totalorder %s138, %s141
      %p147 = scmp.eq.s32.totalorder %s18, 0
      %p148 = por %p146, %p147
      %p149 = scmp.ne.s32.totalorder %s138, %s141
      %p150 = scmp.eq.s32.totalorder %s23, 1
      %p151 = por %p149, %p150
      %p152 = scmp.ne.s32.totalorder %s141, %s142
      %p153 = scmp.eq.s32.totalorder %s23, 0
      %p154 = por %p152, %p153
      %p155 = scmp.ne.s32.totalorder %s141, %s142
      %p156 = scmp.eq.s32.totalorder %s24, 1
      %p157 = por %p155, %p156
      %p159 = scmp.ne.s32.totalorder %s142, %s158
      %p160 = scmp.eq.s32.totalorder %s24, 0
      %p161 = por %p159, %p160
      %p162 = scmp.le.s32.totalorder 1, %s18
      %p163 = scmp.lt.s32.totalorder %s18, 3
      %p164 = pnand %p162, %p163
      %p165 = pneg %p164
      // Predicated region
      $region9: #{tpu_custom_call.1} parent=5 // pred_check
        _
      $region10: #{tpu_custom_call.1} parent=5 // pred_check_branch
        %167 = sbr.rel (%p164) target = $region12
      $region11: #{tpu_custom_call.1} parent=5 // pred_region
        %s168 = ssub.s32 %s18, 1
        // Predicated region
        $region13: #{tpu_custom_call.1} parent=11 // pred_check
          %p169 = pneg %p65
        $region14: #{tpu_custom_call.1} parent=11 // pred_check_branch
          %171 = sbr.rel (%p169) target = $region16
        $region15: #{tpu_custom_call.1} parent=11 // pred_region
          %s173 = ssub.s32 2048, 2048
          %174 = vsyncadd [#allocation6], %s173
          %s175 = sshll.u32 [#allocation5], 4
          %s176 = int_to_ptr.vmem [resolvable:$true] %s175
          %181 = dma.hbm_to_vmem [thread:$0]  %s1, 2048, %s176, [#allocation6], 128, 128, 8
        $region16: #{tpu_custom_call.1} parent=11 // pred_fallthru
          _
        // Predicated region
        $region17: #{tpu_custom_call.1} parent=11 // pred_check
          %p182 = pneg %p86
        $region18: #{tpu_custom_call.1} parent=11 // pred_check_branch
          %184 = sbr.rel (%p182) target = $region20
        $region19: #{tpu_custom_call.1} parent=11 // pred_region
          _
        $region20: #{tpu_custom_call.1} parent=11 // pred_fallthru
          _
        // Predicated region
        $region21: #{tpu_custom_call.1} parent=11 // pred_check
          %p185 = pneg %p107
        $region22: #{tpu_custom_call.1} parent=11 // pred_check_branch
          %187 = sbr.rel (%p185) target = $region24
        $region23: #{tpu_custom_call.1} parent=11 // pred_region
          %s189 = ssub.s32 2048, 2048
          %190 = vsyncadd [#allocation6], %s189
          %s191 = sshll.u32 [#allocation7], 4
          %s192 = int_to_ptr.vmem [resolvable:$true] %s191
          %197 = dma.hbm_to_vmem [thread:$0]  %s3, 2048, %s192, [#allocation6], 128, 128, 8
        $region24: #{tpu_custom_call.1} parent=11 // pred_fallthru
          _
        // Predicated region
        $region25: #{tpu_custom_call.1} parent=11 // pred_check
          %p198 = pneg %p128
        $region26: #{tpu_custom_call.1} parent=11 // pred_check_branch
          %200 = sbr.rel (%p198) target = $region28
        $region27: #{tpu_custom_call.1} parent=11 // pred_region
          _
        $region28: #{tpu_custom_call.1} parent=11 // pred_fallthru
          _
      $region12: #{tpu_custom_call.1} parent=5 // pred_fallthru
        _
      %p201 = scmp.lt.s32.totalorder %s18, 2
      // Predicated region
      $region29: #{tpu_custom_call.1} parent=5 // pred_check
        %p202 = pneg %p201
      $region30: #{tpu_custom_call.1} parent=5 // pred_check_branch
        %204 = sbr.rel (%p202) target = $region32
      $region31: #{tpu_custom_call.1} parent=5 // pred_region
        // Predicated region
        $region33: #{tpu_custom_call.1} parent=31 // pred_check
          %p205 = pneg %p38
        $region34: #{tpu_custom_call.1} parent=31 // pred_check_branch
          %207 = sbr.rel (%p205) target = $region36
        $region35: #{tpu_custom_call.1} parent=31 // pred_region
          %s208 = sand.u32 %s28, 1
          %s209 = scalar_lea.sflag [#allocation3], %s208
          %s210 = sand.u32 %s28, 1
          %s211 = smul.addr %s210, 16
          %s212 = scalar_lea.vmem [#allocation2], %s211
          %s213 = smul.u32 2, %s18
          %s214 = ssub.s32 3, %s213
          %p215 = scmp.lt.s32.totalorder %s214, 2
          %s216 = scalar_select %p215, %s214, 2
          %s217 = smul.u32 128, %s216
          %s219 = ssub.s32 256, %s217
          %220 = vsyncadd %s209, %s219
          %p221 = scmp.ne.s32.totalorder 0, %s217
          %s222 = smul.addr %s213, 128
          %s223 = scalar_lea.hbm %s0, %s222
          %s224 = smul.u32 8, %s216
          %s225 = sshll.u32 %s212, 4
          %s226 = int_to_ptr.vmem [resolvable:$true] %s225
          %s227 = sshll.u32 %s224, 4
          %231 = dma.hbm_to_vmem [thread:$0]  (%p221), %s223, %s227, %s226, %s209, 128, 128, 8
        $region36: #{tpu_custom_call.1} parent=31 // pred_fallthru
          _
      $region32: #{tpu_custom_call.1} parent=5 // pred_fallthru
        _
      %p232 = scmp.le.s32.totalorder 1, %s18
      %p233 = scmp.lt.s32.totalorder %s18, 3
      %p234 = pnand %p232, %p233
      %p235 = pneg %p234
      // Predicated region
      $region37: #{tpu_custom_call.1} parent=5 // pred_check
        _
      $region38: #{tpu_custom_call.1} parent=5 // pred_check_branch
        %237 = sbr.rel (%p234) target = $region40
      $region39: #{tpu_custom_call.1} parent=5 // pred_region
        %s238 = ssub.s32 %s18, 1
        %s239 = sand.u32 %s31, 1
        %s240 = scalar_lea.sflag [#allocation3], %s239
        %s241 = sand.u32 %s31, 1
        %s242 = smul.addr %s241, 16
        %s243 = scalar_lea.vmem [#allocation2], %s242
        // Predicated region
        $region41: #{tpu_custom_call.1} parent=39 // pred_check
          %p244 = pneg %p44
        $region42: #{tpu_custom_call.1} parent=39 // pred_check_branch
          %246 = sbr.rel (%p244) target = $region44
        $region43: #{tpu_custom_call.1} parent=39 // pred_region
          %247 = dma.done %s240, 256
        $region44: #{tpu_custom_call.1} parent=39 // pred_fallthru
          _
        // Predicated region
        $region45: #{tpu_custom_call.1} parent=39 // pred_check
          %p248 = pneg %p65
        $region46: #{tpu_custom_call.1} parent=39 // pred_check_branch
          %250 = sbr.rel (%p248) target = $region48
        $region47: #{tpu_custom_call.1} parent=39 // pred_region
          %251 = dma.done [#allocation6], 2048
        $region48: #{tpu_custom_call.1} parent=39 // pred_fallthru
          _
        // Predicated region
        $region49: #{tpu_custom_call.1} parent=39 // pred_check
          %p252 = pneg %p107
        $region50: #{tpu_custom_call.1} parent=39 // pred_check_branch
          %254 = sbr.rel (%p252) target = $region52
        $region51: #{tpu_custom_call.1} parent=39 // pred_region
          %255 = dma.done [#allocation6], 2048
        $region52: #{tpu_custom_call.1} parent=39 // pred_fallthru
          _
        %s256 = sand.u32 %s31, 1
        %s257 = scalar_lea.sflag [#allocation3], %s256
        %s258 = sand.u32 %s31, 1
        %s259 = smul.addr %s258, 16
        %s260 = scalar_lea.vmem [#allocation2], %s259
        %p261 = pneg %p44
        %p262 = pneg %p41
        %p263 = pneg %p65
        %p264 = pneg %p62
        %p265 = pneg %p86
        %p266 = pneg %p83
        %p267 = pneg %p107
        %p268 = pneg %p104
        %p269 = pneg %p128
        %p270 = pneg %p125
        %p271 = pneg %p154
        %p272 = pneg %p151
        %s273 = sand.u32 %s141, 1
        %s274 = scalar_lea.sflag [#allocation4], %s273
        %s275 = sand.u32 %s141, 1
        %s276 = smul.addr %s275, 16
        %s277 = scalar_lea.vmem [#allocation8], %s276
        %s278 = smul.u32 2, %s23
        %s279 = ssub.s32 3, %s278
        %p280 = scmp.lt.s32.totalorder %s279, 2
        %s281 = scalar_select %p280, %s279, 2
        %s282 = smul.u32 128, %s281
        %s283 = smul.u32 2, %s23
        %s284 = ssub.s32 3, %s283
        %p285 = scmp.lt.s32.totalorder %s284, 2
        %s286 = scalar_select %p285, %s284, 2
        %s287 = smul.u32 128, %s286
        %v288 = vld [vmem:[%s243] sm:$0xff]
        %v289 = vld [vmem:[%s243 + $0x8] sm:$0xff]
        %v290 = vld [vmem:[#allocation5] sm:$0xff]
        %v291 = vld [vmem:[#allocation5 + $0x8] sm:$0xff]
        %v292 = vld [vmem:[#allocation5 + $0x10] sm:$0xff]
        %v293 = vld [vmem:[#allocation5 + $0x18] sm:$0xff]
        %v294 = vld [vmem:[#allocation5 + $0x20] sm:$0xff]
        %v295 = vld [vmem:[#allocation5 + $0x28] sm:$0xff]
        %v296 = vld [vmem:[#allocation5 + $0x30] sm:$0xff]
        %v297 = vld [vmem:[#allocation5 + $0x38] sm:$0xff]
        %v298 = vld [vmem:[#allocation5 + $0x40] sm:$0xff]
        %v299 = vld [vmem:[#allocation5 + $0x48] sm:$0xff]
        %v300 = vld [vmem:[#allocation5 + $0x50] sm:$0xff]
        %v301 = vld [vmem:[#allocation5 + $0x58] sm:$0xff]
        %v302 = vld [vmem:[#allocation5 + $0x60] sm:$0xff]
        %v303 = vld [vmem:[#allocation5 + $0x68] sm:$0xff]
        %v304 = vld [vmem:[#allocation5 + $0x70] sm:$0xff]
        %v305 = vld [vmem:[#allocation5 + $0x78] sm:$0xff]
        %v306 = vld [vmem:[%s2] sm:$0x1]
        %v308 = vlaneseq
        %v309 = vshrl.u32 %v308, 7
        %v310 = vsub.s32 0, %v309
        %v311 = vrot.slane %v306, %v310
        %313 = vmatprep.subr.mxu0 0.0
        %314 = vmatpush1.msra.mxu0 %v305
        %315 = vmatprep.subr.mxu0 0.0
        %316 = vmatpush1.msra.mxu0 %v304
        %317 = vmatprep.subr.mxu0 0.0
        %318 = vmatpush1.msra.mxu0 %v303
        %319 = vmatprep.subr.mxu0 0.0
        %320 = vmatpush1.msra.mxu0 %v302
        %321 = vmatprep.subr.mxu0 0.0
        %322 = vmatpush1.msra.mxu0 %v301
        %323 = vmatprep.subr.mxu0 0.0
        %324 = vmatpush1.msra.mxu0 %v300
        %325 = vmatprep.subr.mxu0 0.0
        %326 = vmatpush1.msra.mxu0 %v299
        %327 = vmatprep.subr.mxu0 0.0
        %328 = vmatpush1.msra.mxu0 %v298
        %329 = vmatprep.subr.mxu0 0.0
        %330 = vmatpush1.msra.mxu0 %v297
        %331 = vmatprep.subr.mxu0 0.0
        %332 = vmatpush1.msra.mxu0 %v296
        %333 = vmatprep.subr.mxu0 0.0
        %334 = vmatpush1.msra.mxu0 %v295
        %335 = vmatprep.subr.mxu0 0.0
        %336 = vmatpush1.msra.mxu0 %v294
        %337 = vmatprep.subr.mxu0 0.0
        %338 = vmatpush1.msra.mxu0 %v293
        %339 = vmatprep.subr.mxu0 0.0
        %340 = vmatpush1.msra.mxu0 %v292
        %341 = vmatprep.subr.mxu0 0.0
        %342 = vmatpush1.msra.mxu0 %v291
        %343 = vmatprep.subr.mxu0 0.0
        %344 = vmatpush1.msra.mxu0 %v290
        %345 = vmatprep.subr.mxu0 0.0
        %346 = vmatpush2.msra.mxu0 0.0
        %347 = vmatprep.subr.mxu0 0.0
        %348 = vmatpush2.msra.mxu0 0.0
        %349 = vmatprep.subr.mxu0 0.0
        %350 = vmatpush2.msra.mxu0 0.0
        %351 = vmatprep.subr.mxu0 0.0
        %352 = vmatpush2.msra.mxu0 0.0
        %353 = vmatprep.subr.mxu0 0.0
        %354 = vmatpush2.msra.mxu0 0.0
        %355 = vmatprep.subr.mxu0 0.0
        %356 = vmatpush2.msra.mxu0 0.0
        %357 = vmatprep.subr.mxu0 0.0
        %358 = vmatpush2.msra.mxu0 0.0
        %359 = vmatprep.subr.mxu0 0.0
        %360 = vmatpush2.msra.mxu0 0.0
        %361 = vmatprep.subr.mxu0 0.0
        %362 = vmatpush2.msra.mxu0 0.0
        %363 = vmatprep.subr.mxu0 0.0
        %364 = vmatpush2.msra.mxu0 0.0
        %365 = vmatprep.subr.mxu0 0.0
        %366 = vmatpush2.msra.mxu0 0.0
        %367 = vmatprep.subr.mxu0 0.0
        %368 = vmatpush2.msra.mxu0 0.0
        %369 = vmatprep.subr.mxu0 0.0
        %370 = vmatpush2.msra.mxu0 0.0
        %371 = vmatprep.subr.mxu0 0.0
        %372 = vmatpush2.msra.mxu0 0.0
        %373 = vmatprep.subr.mxu0 0.0
        %374 = vmatpush2.msra.mxu0 0.0
        %375 = vmatprep.subr.mxu0 0.0
        %376 = vmatpush2.msra.mxu0 0.0
        %377 = vmatprep.mubr.f32.mxu0 0.0
        %378 = vmatmul.mubr.f32.gmra.mxu0 %v288
        %v379 = vpop.f32.mrf.mxu0
        %v380 = vadd.f32 %v311, %v379
        %v381 = vpop.f32.mrf.mxu0
        %382 = vmatprep.mubr.f32.mxu0 0.0
        %383 = vmatmul.mubr.f32.gmra.mxu0 %v289
        %v384 = vpop.f32.mrf.mxu0
        %v385 = vadd.f32 %v311, %v384
        %v386 = vpop.f32.mrf.mxu0
        %387 = vdwg.mxu0
        %v388 = vmax.f32 %v380, 0.0
        %v389 = vmax.f32 %v385, 0.0
        %v390 = vld [vmem:[#allocation7] sm:$0xff]
        %v391 = vld [vmem:[#allocation7 + $0x8] sm:$0xff]
        %v392 = vld [vmem:[#allocation7 + $0x10] sm:$0xff]
        %v393 = vld [vmem:[#allocation7 + $0x18] sm:$0xff]
        %v394 = vld [vmem:[#allocation7 + $0x20] sm:$0xff]
        %v395 = vld [vmem:[#allocation7 + $0x28] sm:$0xff]
        %v396 = vld [vmem:[#allocation7 + $0x30] sm:$0xff]
        %v397 = vld [vmem:[#allocation7 + $0x38] sm:$0xff]
        %v398 = vld [vmem:[#allocation7 + $0x40] sm:$0xff]
        %v399 = vld [vmem:[#allocation7 + $0x48] sm:$0xff]
        %v400 = vld [vmem:[#allocation7 + $0x50] sm:$0xff]
        %v401 = vld [vmem:[#allocation7 + $0x58] sm:$0xff]
        %v402 = vld [vmem:[#allocation7 + $0x60] sm:$0xff]
        %v403 = vld [vmem:[#allocation7 + $0x68] sm:$0xff]
        %v404 = vld [vmem:[#allocation7 + $0x70] sm:$0xff]
        %v405 = vld [vmem:[#allocation7 + $0x78] sm:$0xff]
        %v406 = vld [vmem:[%s4] sm:$0x1]
        %v408 = vlaneseq
        %v409 = vshrl.u32 %v408, 7
        %v410 = vsub.s32 0, %v409
        %v411 = vrot.slane %v406, %v410
        %413 = vmatprep.subr.mxu0 0.0
        %414 = vmatpush1.msra.mxu0 %v405
        %415 = vmatprep.subr.mxu0 0.0
        %416 = vmatpush1.msra.mxu0 %v404
        %417 = vmatprep.subr.mxu0 0.0
        %418 = vmatpush1.msra.mxu0 %v403
        %419 = vmatprep.subr.mxu0 0.0
        %420 = vmatpush1.msra.mxu0 %v402
        %421 = vmatprep.subr.mxu0 0.0
        %422 = vmatpush1.msra.mxu0 %v401
        %423 = vmatprep.subr.mxu0 0.0
        %424 = vmatpush1.msra.mxu0 %v400
        %425 = vmatprep.subr.mxu0 0.0
        %426 = vmatpush1.msra.mxu0 %v399
        %427 = vmatprep.subr.mxu0 0.0
        %428 = vmatpush1.msra.mxu0 %v398
        %429 = vmatprep.subr.mxu0 0.0
        %430 = vmatpush1.msra.mxu0 %v397
        %431 = vmatprep.subr.mxu0 0.0
        %432 = vmatpush1.msra.mxu0 %v396
        %433 = vmatprep.subr.mxu0 0.0
        %434 = vmatpush1.msra.mxu0 %v395
        %435 = vmatprep.subr.mxu0 0.0
        %436 = vmatpush1.msra.mxu0 %v394
        %437 = vmatprep.subr.mxu0 0.0
        %438 = vmatpush1.msra.mxu0 %v393
        %439 = vmatprep.subr.mxu0 0.0
        %440 = vmatpush1.msra.mxu0 %v392
        %441 = vmatprep.subr.mxu0 0.0
        %442 = vmatpush1.msra.mxu0 %v391
        %443 = vmatprep.subr.mxu0 0.0
        %444 = vmatpush1.msra.mxu0 %v390
        %445 = vmatprep.subr.mxu0 0.0
        %446 = vmatpush2.msra.mxu0 0.0
        %447 = vmatprep.subr.mxu0 0.0
        %448 = vmatpush2.msra.mxu0 0.0
        %449 = vmatprep.subr.mxu0 0.0
        %450 = vmatpush2.msra.mxu0 0.0
        %451 = vmatprep.subr.mxu0 0.0
        %452 = vmatpush2.msra.mxu0 0.0
        %453 = vmatprep.subr.mxu0 0.0
        %454 = vmatpush2.msra.mxu0 0.0
        %455 = vmatprep.subr.mxu0 0.0
        %456 = vmatpush2.msra.mxu0 0.0
        %457 = vmatprep.subr.mxu0 0.0
        %458 = vmatpush2.msra.mxu0 0.0
        %459 = vmatprep.subr.mxu0 0.0
        %460 = vmatpush2.msra.mxu0 0.0
        %461 = vmatprep.subr.mxu0 0.0
        %462 = vmatpush2.msra.mxu0 0.0
        %463 = vmatprep.subr.mxu0 0.0
        %464 = vmatpush2.msra.mxu0 0.0
        %465 = vmatprep.subr.mxu0 0.0
        %466 = vmatpush2.msra.mxu0 0.0
        %467 = vmatprep.subr.mxu0 0.0
        %468 = vmatpush2.msra.mxu0 0.0
        %469 = vmatprep.subr.mxu0 0.0
        %470 = vmatpush2.msra.mxu0 0.0
        %471 = vmatprep.subr.mxu0 0.0
        %472 = vmatpush2.msra.mxu0 0.0
        %473 = vmatprep.subr.mxu0 0.0
        %474 = vmatpush2.msra.mxu0 0.0
        %475 = vmatprep.subr.mxu0 0.0
        %476 = vmatpush2.msra.mxu0 0.0
        %477 = vmatprep.mubr.f32.mxu0 0.0
        %478 = vmatmul.mubr.f32.gmra.mxu0 %v388
        %v479 = vpop.f32.mrf.mxu0
        %v480 = vadd.f32 %v411, %v479
        %v481 = vpop.f32.mrf.mxu0
        %482 = vmatprep.mubr.f32.mxu0 0.0
        %483 = vmatmul.mubr.f32.gmra.mxu0 %v389
        %v484 = vpop.f32.mrf.mxu0
        %v485 = vadd.f32 %v411, %v484
        %v486 = vpop.f32.mrf.mxu0
        %487 = vdwg.mxu0
        %488 = vst [vmem:[%s277] sm:$0xff] %v480
        %489 = vst [vmem:[%s277 + $0x8] sm:$0xff] %v485
        %s490 = sand.u32 %s141, 1
        %s491 = scalar_lea.sflag [#allocation4], %s490
        %s492 = sand.u32 %s141, 1
        %s493 = smul.addr %s492, 16
        %s494 = scalar_lea.vmem [#allocation8], %s493
        // Predicated region
        $region53: #{tpu_custom_call.1} parent=39 // pred_check
          %p495 = pneg %p151
        $region54: #{tpu_custom_call.1} parent=39 // pred_check_branch
          %497 = sbr.rel (%p495) target = $region56
        $region55: #{tpu_custom_call.1} parent=39 // pred_region
          %s498 = smul.u32 2, %s23
          %s499 = ssub.s32 3, %s498
          %p500 = scmp.lt.s32.totalorder %s499, 2
          %s501 = scalar_select %p500, %s499, 2
          %s502 = smul.u32 128, %s501
          %s504 = ssub.s32 256, %s502
          %505 = vsyncadd %s491, %s504
          %p506 = scmp.ne.s32.totalorder 0, %s502
          %s507 = smul.addr %s498, 128
          %s508 = scalar_lea.hbm %s5, %s507
          %s509 = smul.u32 8, %s501
          %s510 = sshll.u32 %s494, 4
          %s511 = int_to_ptr.vmem [resolvable:$true] %s510
          %s512 = sshll.u32 %s509, 4
          %516 = dma.vmem_to_hbm [thread:$0]  (%p506), %s511, %s512, %s508, %s491, 128, 128, 8
        $region56: #{tpu_custom_call.1} parent=39 // pred_fallthru
          _
      $region40: #{tpu_custom_call.1} parent=5 // pred_fallthru
        _
      %p517 = scmp.le.s32.totalorder 2, %s18
      // Predicated region
      $region57: #{tpu_custom_call.1} parent=5 // pred_check
        %p518 = pneg %p517
      $region58: #{tpu_custom_call.1} parent=5 // pred_check_branch
        %520 = sbr.rel (%p518) target = $region60
      $region59: #{tpu_custom_call.1} parent=5 // pred_region
        %s521 = ssub.s32 %s18, 2
        // Predicated region
        $region61: #{tpu_custom_call.1} parent=59 // pred_check
          %p522 = pneg %p157
        $region62: #{tpu_custom_call.1} parent=59 // pred_check_branch
          %524 = sbr.rel (%p522) target = $region64
        $region63: #{tpu_custom_call.1} parent=59 // pred_region
          %s525 = sand.u32 %s142, 1
          %s526 = scalar_lea.sflag [#allocation4], %s525
          %s527 = sand.u32 %s142, 1
          %s528 = smul.addr %s527, 16
          %s529 = scalar_lea.vmem [#allocation8], %s528
          %530 = dma.done %s526, 256
        $region64: #{tpu_custom_call.1} parent=59 // pred_fallthru
          _
      $region60: #{tpu_custom_call.1} parent=5 // pred_fallthru
        _
    $region6: #{tpu_custom_call.1} parent=1 // loop_footer
      %s22 = sadd.s32 1, %s18
    $region7: #{tpu_custom_call.1} parent=1 // loop_footer_branch
      %17 = sbr.rel target = $region3
    $region8: #{tpu_custom_call.1} parent=1 // loop_exit
      _
    %531 = vsyncpa [#allocation3], 1
    %s532 = scalar_lea.sflag [#allocation3], 1
    %533 = vsyncpa %s532, 1
    %534 = vsyncpa [#allocation6], 1
    %535 = vsyncpa [#allocation4], 1
    %s536 = scalar_lea.sflag [#allocation4], 1
    %537 = vsyncpa %s536, 1

</llo_original>
